<compile_context>
chip_gen: v7x
topology: tpu7x:2x2x1
jax: 0.10.0
libtpu: 0.0.40
codegen_flags: <defaults>
</compile_context>

<pallas_src>
import functools
import math

import jax
import jax.numpy as jnp
from jax.experimental import pallas as pl
from jax.experimental.pallas import tpu as pltpu


# ------------------------------ tiling helpers ------------------------------

def _round_up(x, m):
    return (x + m - 1) // m * m


def _pick_tile(padded_dim, cap):
    """Largest multiple-of-128 divisor of `padded_dim` that is <= cap."""
    best = 128
    t = 128
    while t <= min(padded_dim, cap):
        if padded_dim % t == 0:
            best = t
        t += 128
    return best


def _choose_m_tiling(M, cap=1024):
    """Return (Mp, tm): pad rows to Mp, tile with tm.

    Guarantees >=2 parallel M blocks whenever M > 16 so that a collapsed
    (1x1) parallel grid never idles one of v7x's two TensorCores."""
    if M <= 16:
        m = _round_up(max(M, 8), 16)
        return m, m
    if M <= 2 * cap:
        Mp = _round_up(M, 32)
        return Mp, Mp // 2            # exactly 2 parallel blocks
    Mp = _round_up(M, cap)
    return Mp, cap


# ----------------------------- Pallas kernels -------------------------------

def _mm_kernel(x_ref, w_ref, b_ref, o_ref, *, relu):
    out = jnp.dot(x_ref[...], w_ref[...],
                  preferred_element_type=jnp.float32) + b_ref[...]
    if relu:
        out = jnp.maximum(out, 0.0)
    o_ref[...] = out.astype(o_ref.dtype)


def _mm_res_kernel(x_ref, w_ref, b_ref, r_ref, o_ref, *, relu):
    out = (jnp.dot(x_ref[...], w_ref[...], preferred_element_type=jnp.float32)
           + b_ref[...] + r_ref[...].astype(jnp.float32))
    if relu:
        out = jnp.maximum(out, 0.0)
    o_ref[...] = out.astype(o_ref.dtype)


def _conv0_skip_kernel(x_ref, w0_ref, b0_ref, ws_ref, bs_ref,
                       o0_ref, os_ref, *, c0, cin):
    """Fused: out0 = relu(X @ W0 + b0); skip = X[:, center_tap] @ Ws + bs."""
    x = x_ref[...]
    main = jnp.dot(x, w0_ref[...],
                   preferred_element_type=jnp.float32) + b0_ref[...]
    o0_ref[...] = jnp.maximum(main, 0.0).astype(o0_ref.dtype)
    xs = x[:, c0:c0 + cin]                      # centre-tap columns == 1x1 skip input
    skip = jnp.dot(xs, ws_ref[...],
                   preferred_element_type=jnp.float32) + bs_ref[...]
    os_ref[...] = skip.astype(os_ref.dtype)


def _stream_kernel(x_ref, w_ref, b_ref, o_ref, acc_ref):
    """GEMV-like streaming matmul: tiny M, K tiled as innermost grid axis."""
    @pl.when(pl.program_id(1) == 0)
    def _():
        acc_ref[...] = jnp.zeros_like(acc_ref)

    acc_ref[...] += jnp.dot(x_ref[...], w_ref[...],
                            preferred_element_type=jnp.float32)

    @pl.when(pl.program_id(1) == pl.num_programs(1) - 1)
    def _():
        o_ref[...] = (acc_ref[...] + b_ref[...]).astype(o_ref.dtype)


def _measurement_kernel(s_ref, wfm_ref, bfm_ref, w0_ref, b0_ref,
                        w1_ref, b1_ref, w2_ref, b2_ref, o_ref):
    m = jnp.dot(s_ref[...], wfm_ref[...],
                preferred_element_type=jnp.float32) + bfm_ref[...]
    mb = m.astype(jnp.bfloat16)
    h = jnp.dot(mb, w0_ref[...],
                preferred_element_type=jnp.float32) + b0_ref[...]
    h = jnp.maximum(h, 0.0)                       # dropout = identity (eval)
    h = jnp.dot(h.astype(jnp.bfloat16), w1_ref[...],
                preferred_element_type=jnp.float32) + b1_ref[...]
    skip = jnp.dot(mb, w2_ref[...],
                   preferred_element_type=jnp.float32) + b2_ref[...]
    o_ref[...] = jnp.maximum(h + skip, 0.0)


# --------------------------- matmul wrappers ---------------------------------

def conv_matmul(x, w, b, residual=None, relu=False, out_dtype=jnp.bfloat16):
    """out = act(x @ w + b [+ residual]).  x:(M,K) bf16, w:(K,N) bf16, b:(1,N) f32.

    Full-K / full-N blocks (no channel padding, no slice back), only M is
    padded and tiled; 1-D parallel grid over M."""
    M, K = x.shape
    K2, N = w.shape
    assert K == K2
    Mp, tm = _choose_m_tiling(M)
    if Mp != M:
        x = jnp.pad(x, ((0, Mp - M), (0, 0)))
        if residual is not None:
            residual = jnp.pad(residual, ((0, Mp - M), (0, 0)))

    in_specs = [pl.BlockSpec((tm, K), lambda i: (i, 0)),
                pl.BlockSpec((K, N), lambda i: (0, 0)),
                pl.BlockSpec((1, N), lambda i: (0, 0))]
    args = [x, w, b]
    if residual is None:
        kernel = functools.partial(_mm_kernel, relu=relu)
    else:
        in_specs.append(pl.BlockSpec((tm, N), lambda i: (i, 0)))
        args.append(residual)
        kernel = functools.partial(_mm_res_kernel, relu=relu)

    out = pl.pallas_call(
        kernel,
        out_shape=jax.ShapeDtypeStruct((Mp, N), out_dtype),
        grid=(Mp // tm,),
        in_specs=in_specs,
        out_specs=pl.BlockSpec((tm, N), lambda i: (i, 0)),
        compiler_params=pltpu.CompilerParams(
            dimension_semantics=("parallel",)),
    )(*args)
    return out[:M] if Mp != M else out


def reduce_matmul(x, w, b, out_dtype=jnp.float32):
    """Streaming matmul for the `reduce` Linear: tiny M, huge K.

    Big weight tiles (tk<=2048, tn<=1024), K innermost reduction axis with an
    f32 VMEM accumulator, optional 3-deep weight buffering, explicit VMEM
    limit (v5e's default scoped VMEM is only 16 MiB)."""
    M, K = x.shape
    K2, N = w.shape
    assert K == K2
    Mp = _round_up(M, 16)
    Kp = _round_up(K, 128)
    Np = _round_up(N, 128)
    xp = x if (Mp == M and Kp == K) else jnp.pad(x, ((0, Mp - M), (0, Kp - K)))
    wp = w if (Kp == K and Np == N) else jnp.pad(w, ((0, Kp - K), (0, Np - N)))
    bp = b if Np == N else jnp.pad(b, ((0, 0), (0, Np - N)))
    tk = _pick_tile(Kp, 2048)
    tn = _pick_tile(Np, 1024)
    k_steps = Kp // tk
    nbuf = 3 if k_steps >= 4 else None   # deeper weight pipeline only for long K

    def call(num_buffers):
        buffers = num_buffers if num_buffers is not None else 2
        vmem = (buffers * tk * tn * 2 + 2 * Mp * tk * 2 + 2 * Mp * tn * 4
                + Mp * tn * 4 + 2 * tn * 4)
        vmem = min(max(int(vmem * 1.5) + (4 << 20), 16 << 20), 48 << 20)
        if num_buffers is not None and hasattr(pl, "Buffered"):
            w_spec = pl.BlockSpec((tk, tn), lambda j, k: (k, j),
                                  pipeline_mode=pl.Buffered(num_buffers))
        else:
            w_spec = pl.BlockSpec((tk, tn), lambda j, k: (k, j))
        return pl.pallas_call(
            _stream_kernel,
            out_shape=jax.ShapeDtypeStruct((Mp, Np), out_dtype),
            grid=(Np // tn, k_steps),
            in_specs=[pl.BlockSpec((Mp, tk), lambda j, k: (0, k)),
                      w_spec,
                      pl.BlockSpec((1, tn), lambda j, k: (0, j))],
            out_specs=pl.BlockSpec((Mp, tn), lambda j, k: (0, j)),
            scratch_shapes=[pltpu.VMEM((Mp, tn), jnp.float32)],
            compiler_params=pltpu.CompilerParams(
                dimension_semantics=("parallel", "arbitrary"),
                vmem_limit_bytes=vmem),
        )(xp, wp, bp)

    if nbuf is None:
        out = call(None)
    else:
        try:
            out = call(nbuf)
        except Exception:                 # Buffered/pipeline_mode unsupported
            out = call(None)
    return out[:M, :N]


# ---------------- fused measurement branch (4 Linears, 1 launch) ------------

def measurement_encoder_pallas(state, p_first_m, p_enc):
    B = state.shape[0]
    Bp = _round_up(B, 8)
    sp = state.astype(jnp.bfloat16)
    if Bp != B:
        sp = jnp.pad(sp, ((0, Bp - B), (0, 0)))
    wfm, bfm = p_first_m
    (w0, b0), (w1, b1), (w2, b2) = p_enc
    args = (sp, wfm, bfm, w0, b0, w1, b1, w2, b2)

    out = pl.pallas_call(
        _measurement_kernel,
        out_shape=jax.ShapeDtypeStruct((Bp, 256), jnp.float32),
        grid=(1,),
        in_specs=[pl.BlockSpec(a.shape, lambda i: (0, 0)) for a in args],
        out_specs=pl.BlockSpec((Bp, 256), lambda i: (0, 0)),
    )(*args)
    return out[:B]


# ------------------ Conv2d = NHWC im2col + fused Pallas matmul ---------------

def _im2col(x_nhwc, kh, kw, stride, padding):
    B, H, W_, Cin = x_nhwc.shape
    Ho = (H + 2 * padding - kh) // stride + 1
    Wo = (W_ + 2 * padding - kw) // stride + 1
    xp = x_nhwc
    if padding:
        xp = jnp.pad(x_nhwc, ((0, 0), (padding, padding),
                              (padding, padding), (0, 0)))
    taps = [xp[:, dy:dy + stride * Ho:stride, dx:dx + stride * Wo:stride, :]
            for dy in range(kh) for dx in range(kw)]
    patches = taps[0] if len(taps) == 1 else jnp.concatenate(taps, axis=-1)
    return patches.reshape(B * Ho * Wo, kh * kw * Cin), Ho, Wo


def conv2d_pallas(x_nhwc, cw, stride, padding, relu=False, residual=None):
    """x: (B,H,W,Cin) bf16 NHWC; cw: prepared conv params; residual: NHWC."""
    B, H, W_, Cin = x_nhwc.shape
    kh, kw, cout = cw["kh"], cw["kw"], cw["cout"]
    assert cw["cin"] == Cin
    X, Ho, Wo = _im2col(x_nhwc, kh, kw, stride, padding)
    r2 = residual.reshape(B * Ho * Wo, cout) if residual is not None else None
    out = conv_matmul(X, cw["w"], cw["b"], residual=r2, relu=relu)
    return out.reshape(B, Ho, Wo, cout)


def conv0_skip_pallas(x_nhwc, cw0, cws, stride, padding):
    """Fused first conv of a residual block + its 1x1 skip conv.

    The 1x1/stride-s skip's input pixel equals the centre im2col tap of the
    main conv (requires padding == kernel//2), so both matmuls share one X
    DMA inside a single dual-output kernel."""
    B, H, W_, Cin = x_nhwc.shape
    kh, kw, cout = cw0["kh"], cw0["kw"], cw0["cout"]
    cskip = cws["cout"]
    assert cws["kh"] == 1 and cws["kw"] == 1 and cws["cin"] == Cin
    assert padding == kh // 2 and padding == kw // 2
    X, Ho, Wo = _im2col(x_nhwc, kh, kw, stride, padding)
    M, K = X.shape
    Mp, tm = _choose_m_tiling(M)
    if Mp != M:
        X = jnp.pad(X, ((0, Mp - M), (0, 0)))
    c0 = ((kh // 2) * kw + (kw // 2)) * Cin
    kernel = functools.partial(_conv0_skip_kernel, c0=c0, cin=Cin)

    o0, oskip = pl.pallas_call(
        kernel,
        out_shape=(jax.ShapeDtypeStruct((Mp, cout), jnp.bfloat16),
                   jax.ShapeDtypeStruct((Mp, cskip), jnp.bfloat16)),
        grid=(Mp // tm,),
        in_specs=[pl.BlockSpec((tm, K), lambda i: (i, 0)),
                  pl.BlockSpec((K, cout), lambda i: (0, 0)),
                  pl.BlockSpec((1, cout), lambda i: (0, 0)),
                  pl.BlockSpec((Cin, cskip), lambda i: (0, 0)),
                  pl.BlockSpec((1, cskip), lambda i: (0, 0))],
        out_specs=(pl.BlockSpec((tm, cout), lambda i: (i, 0)),
                   pl.BlockSpec((tm, cskip), lambda i: (i, 0))),
        compiler_params=pltpu.CompilerParams(
            dimension_semantics=("parallel",)),
    )(X, cw0["w"], cw0["b"], cws["w"], cws["b"])
    o0 = o0[:M].reshape(B, Ho, Wo, cout)
    oskip = oskip[:M].reshape(B, Ho, Wo, cskip)
    return o0, oskip


# ------------------------------ Model forward --------------------------------

def conv_res_block(x, p_main0, p_main1, p_skip, stride, pad_main):
    # out0 = dropout(relu(conv0(x)));  skip = 1x1 conv(x)   -- one fused launch
    out0, skip = conv0_skip_pallas(x, p_main0, p_skip, stride, pad_main)
    # out = relu(conv1(out0) + skip)   -- residual add + relu fused in-kernel
    return conv2d_pallas(out0, p_main1, stride=1, padding=pad_main,
                         relu=True, residual=skip)


def fcresnet_forward(prepped, front_img, state):
    # single layout/dtype change at the boundary: NCHW f32 -> NHWC bf16
    x = jnp.transpose(front_img, (0, 2, 3, 1)).astype(jnp.bfloat16)

    e = conv2d_pallas(x, prepped["first"], stride=2, padding=1, relu=False)
    e = conv_res_block(e, *prepped["res_second"], stride=2, pad_main=2)
    e = conv_res_block(e, *prepped["res_third"], stride=2, pad_main=2)
    e = conv_res_block(e, *prepped["res_fourth"], stride=1, pad_main=1)
    e = conv_res_block(e, *prepped["res_fifth"], stride=1, pad_main=1)

    # one transpose back to NCHW: preserves PyTorch .view flatten order and the
    # returned feature-map layout.
    fmap = jnp.transpose(e, (0, 3, 1, 2))                    # (B, 64, Ho, Wo)
    flat = fmap.reshape(fmap.shape[0], -1)                   # bf16
    features = reduce_matmul(flat, *prepped["reduce"])       # f32 (B, 1024)

    encoded_m = measurement_encoder_pallas(
        state, prepped["first_m"], prepped["measurement_encoder"])

    features = jnp.concatenate([features, encoded_m], axis=1)
    return features, fmap


# ------------------------ One-time parameter preparation ---------------------

def prepare_params(params):
    """Reshape/transpose + cast all weights ONCE (not per forward)."""
    def conv_prep(w, b):
        cout, cin, kh, kw = w.shape
        wm = jnp.transpose(w, (2, 3, 1, 0)).reshape(kh * kw * cin, cout)
        return dict(w=wm.astype(jnp.bfloat16),
                    b=b.astype(jnp.float32).reshape(1, cout),
                    cout=cout, cin=cin, kh=kh, kw=kw)

    def lin_prep(w, b):
        return (w.T.astype(jnp.bfloat16),
                b.astype(jnp.float32).reshape(1, -1))

    prepped = {"first": conv_prep(*params["first"])}
    for name in ("res_second", "res_third", "res_fourth", "res_fifth"):
        prepped[name] = tuple(conv_prep(*p) for p in params[name])
    prepped["reduce"] = lin_prep(*params["reduce"])
    prepped["first_m"] = lin_prep(*params["first_m"])
    prepped["measurement_encoder"] = tuple(
        lin_prep(*p) for p in params["measurement_encoder"])
    return prepped


# ------------------------------ Parameter init -------------------------------

def init_conv(key, cout, cin, kh, kw):
    kw_, kb = jax.random.split(key)
    bound = 1.0 / math.sqrt(cin * kh * kw)
    w = jax.random.uniform(kw_, (cout, cin, kh, kw), jnp.float32, -bound, bound)
    b = jax.random.uniform(kb, (cout,), jnp.float32, -bound, bound)
    return w, b


def init_linear(key, out_f, in_f):
    kw_, kb = jax.random.split(key)
    bound = 1.0 / math.sqrt(in_f)
    w = jax.random.uniform(kw_, (out_f, in_f), jnp.float32, -bound, bound)
    b = jax.random.uniform(kb, (out_f,), jnp.float32, -bound, bound)
    return w, b


def init_params(key, flatten_dim):
    ks = jax.random.split(key, 20)
    params = {}
    params["first"] = init_conv(ks[0], 24, 3, 5, 5)
    params["res_second"] = (init_conv(ks[1], 36, 24, 5, 5),
                            init_conv(ks[2], 36, 36, 5, 5),
                            init_conv(ks[3], 36, 24, 1, 1))
    params["res_third"] = (init_conv(ks[4], 48, 36, 5, 5),
                           init_conv(ks[5], 48, 48, 5, 5),
                           init_conv(ks[6], 48, 36, 1, 1))
    params["res_fourth"] = (init_conv(ks[7], 64, 48, 3, 3),
                            init_conv(ks[8], 64, 64, 3, 3),
                            init_conv(ks[9], 64, 48, 1, 1))
    params["res_fifth"] = (init_conv(ks[10], 64, 64, 3, 3),
                           init_conv(ks[11], 64, 64, 3, 3),
                           init_conv(ks[12], 64, 64, 1, 1))
    params["reduce"] = init_linear(ks[13], 1024, flatten_dim)
    params["first_m"] = init_linear(ks[14], 128, 9)
    params["measurement_encoder"] = (init_linear(ks[15], 256, 128),
                                     init_linear(ks[16], 256, 256),
                                     init_linear(ks[17], 256, 128))
    return params


# ------------------------- Pure-JAX reference model --------------------------

def _ref_conv(x, w, b, stride, padding):
    out = jax.lax.conv_general_dilated(
        x, w, (stride, stride), ((padding, padding), (padding, padding)),
        dimension_numbers=("NCHW", "OIHW", "NCHW"))
    return out + b[None, :, None, None]


def _ref_linear(x, w, b):
    return jnp.dot(x, w.T, precision=jax.lax.Precision.HIGHEST) + b[None, :]


def ref_forward(params, front_img, state):
    relu = lambda t: jnp.maximum(t, 0.0)

    def conv_block(x, p, stride, pad):
        out = relu(_ref_conv(x, p[0][0], p[0][1], stride, pad))
        out = _ref_conv(out, p[1][0], p[1][1], 1, pad)
        i = _ref_conv(x, p[2][0], p[2][1], stride, 0)
        return relu(out + i)

    e = _ref_conv(front_img, params["first"][0], params["first"][1], 2, 1)
    e = conv_block(e, params["res_second"], 2, 2)
    e = conv_block(e, params["res_third"], 2, 2)
    e = conv_block(e, params["res_fourth"], 1, 1)
    e = conv_block(e, params["res_fifth"], 1, 1)
    fmap = e
    features = _ref_linear(e.reshape(e.shape[0], -1), *params["reduce"])

    m = _ref_linear(state, *params["first_m"])
    p = params["measurement_encoder"]
    out = relu(_ref_linear(m, *p[0]))
    out = _ref_linear(out, *p[1])
    out = relu(out + _ref_linear(m, *p[2]))
    return jnp.concatenate([features, out], axis=1), fmap


# ------------------------------------ Main ------------------------------------

if __name__ == "__main__":
    key = jax.random.PRNGKey(0)
    k_img, k_state, k_params = jax.random.split(key, 3)

    B, H, W = 2, 32, 68                     # small spatial size (instead of 256x900)
    front_img = jax.random.normal(k_img, (B, 3, H, W), jnp.float32)
    state = jax.random.normal(k_state, (B, 9), jnp.float32)

    # spatial flow: 32x68 -> 15x33 -> 8x17 -> 4x9 -> 4x9 -> 4x9 ; 64*4*9 = 2304
    flatten_dim = 64 * 4 * 9
    params = init_params(k_params, flatten_dim)
    prepped = prepare_params(params)        # one-time weight layout/cast

    features, fmap = fcresnet_forward(prepped, front_img, state)
    jax.block_until_ready((features, fmap))

    assert features.shape == (B, 1024 + 256), features.shape
    assert fmap.shape == (B, 64, 4, 9), fmap.shape

    ref_features, ref_map = ref_forward(params, front_img, state)

    def rel_err(a, b):
        a = a.astype(jnp.float32)
        b = b.astype(jnp.float32)
        return float(jnp.max(jnp.abs(a - b)) / (jnp.max(jnp.abs(b)) + 1e-6))

    assert jnp.all(jnp.isfinite(features)) and jnp.all(jnp.isfinite(fmap.astype(jnp.float32)))
    assert rel_err(features, ref_features) < 5e-2, rel_err(features, ref_features)
    assert rel_err(fmap, ref_map) < 5e-2, rel_err(fmap, ref_map)

    print("KERNEL_OK")
</pallas_src>

<mosaic_0001>
module attributes {stable_mosaic.version = 11 : i64} {
  func.func @_mm_kernel(%arg0: i32, %arg1: memref<496x75xbf16, #tpu.memory_space<vmem>>, %arg2: memref<75x24xbf16, #tpu.memory_space<vmem>>, %arg3: memref<1x24xf32, #tpu.memory_space<vmem>>, %arg4: memref<496x24xbf16, #tpu.memory_space<vmem>>) attributes {dimension_semantics = [#tpu.dimension_semantics<parallel>], iteration_bounds = array<i64: 2>, scalar_prefetch = 0 : i64, scratch_operands = 0 : i64, tpu.core_type = #tpu.core_type<tc>, window_params = [{transform_indices = @transform_0, window_bounds = array<i64: 496, 75>}, {pipeline_mode = #tpu.pipeline_mode<synchronous>, transform_indices = @transform_1, window_bounds = array<i64: 75, 24>}, {pipeline_mode = #tpu.pipeline_mode<synchronous>, transform_indices = @transform_2, window_bounds = array<i64: 1, 24>}, {transform_indices = @transform_3, window_bounds = array<i64: 496, 24>}]} {
    %c0 = arith.constant 0 : index
    %c0_0 = arith.constant 0 : index
    %0 = vector.load %arg1[%c0, %c0_0] : memref<496x75xbf16, #tpu.memory_space<vmem>>, vector<496x75xbf16>
    %c0_1 = arith.constant 0 : index
    %c0_2 = arith.constant 0 : index
    %1 = vector.load %arg2[%c0_1, %c0_2] : memref<75x24xbf16, #tpu.memory_space<vmem>>, vector<75x24xbf16>
    %cst = arith.constant dense<0.000000e+00> : vector<496x24xf32>
    %2 = tpu.matmul %0, %1, %cst {dimension_numbers = #tpu.dot_dimension_numbers<[1], [0], [0], [1], [0, 0, 1, 1], [], []>} : vector<496x75xbf16>, vector<75x24xbf16>, vector<496x24xf32> -> vector<496x24xf32>
    %c0_3 = arith.constant 0 : index
    %c0_4 = arith.constant 0 : index
    %3 = vector.load %arg3[%c0_3, %c0_4] : memref<1x24xf32, #tpu.memory_space<vmem>>, vector<1x24xf32>
    %4 = vector.broadcast %3 : vector<1x24xf32> to vector<496x24xf32>
    %5 = arith.addf %2, %4 : vector<496x24xf32>
    %6 = arith.truncf %5 : vector<496x24xf32> to vector<496x24xbf16>
    %c0_5 = arith.constant 0 : index
    %c0_6 = arith.constant 0 : index
    %7 = vector.load %arg4[%c0_5, %c0_6] : memref<496x24xbf16, #tpu.memory_space<vmem>>, vector<496x24xbf16>
    tpu.vector_store %arg4[%c0_5, %c0_6], %6 {strides = array<i32>} : memref<496x24xbf16, #tpu.memory_space<vmem>>, vector<496x24xbf16>,
    return
  }
  func.func @transform_0(%arg0: i32) -> (i32, i32) {
    %c0_i32 = arith.constant 0 : i32
    %c0_i32_0 = arith.constant 0 : i32
    return %arg0, %c0_i32 : i32, i32
  }
  func.func @transform_1(%arg0: i32) -> (i32, i32) {
    %c0_i32 = arith.constant 0 : i32
    %c0_i32_0 = arith.constant 0 : i32
    %c0_i32_1 = arith.constant 0 : i32
    return %c0_i32, %c0_i32_0 : i32, i32
  }
  func.func @transform_2(%arg0: i32) -> (i32, i32) {
    %c0_i32 = arith.constant 0 : i32
    %c0_i32_0 = arith.constant 0 : i32
    %c0_i32_1 = arith.constant 0 : i32
    return %c0_i32, %c0_i32_0 : i32, i32
  }
  func.func @transform_3(%arg0: i32) -> (i32, i32) {
    %c0_i32 = arith.constant 0 : i32
    %c0_i32_0 = arith.constant 0 : i32
    return %arg0, %c0_i32 : i32, i32
  }
}

</mosaic_0001>

<llo_original>
// kernel: tpu_custom_call.1
$region0: #{tpu_custom_call.1}
  #allocation0 [shape = 'u32[]', space=smem, size = 0x4, offset = 0x4, fixed_abs, tag = 'smem constant byte address 0x4 - core index']
  #allocation1 [shape = 'u32[144,128]{1,0:T(1,128)}', space=vmem, size = 0x12000, scoped, tag = 'internal scratch']
  %s0 = inlined_call_operand.vmem [shape: bf16[992,75], index: 0, kind: input, shape index: {}]
  %s1 = inlined_call_operand.vmem [shape: bf16[75,24], index: 1, kind: input, shape index: {}]
  %s2 = inlined_call_operand.vmem [shape: f32[1,24], index: 2, kind: input, shape index: {}]
  %s3 = inlined_call_operand.vmem [shape: bf16[992,24], index: 3, kind: output, shape index: {}]
  %s4 = sld [smem:[#allocation0]]
  $region45: #{tpu_custom_call.1} parent=0
    _
  %s6 = ssub.s32 1, %s4
  %s7 = scalar_select 0, %s6, %s4
  loop: start=0, step=1, limit=4
  $region2: #{tpu_custom_call.1} parent=0 // loop_pre_header
    _
  $region3: #{tpu_custom_call.1} parent=0 // loop_header
    %s9 = sphi 0, %s13
    %p10 = scmp.ge.s32.totalorder %s9, 4
    %s19 = sphi 0, %s21
    %s22 = sphi 0, %s19
    %s23 = sphi 0, %s22
    %s39 = sphi 0, %s23
    %s43 = sphi 0, %s43
    %s45 = sphi 0, %s43
    %s46 = sphi 0, %s45
    %s60 = sphi 0, %s46
    %s64 = sphi 0, %s64
    %s66 = sphi 0, %s64
    %s67 = sphi 0, %s66
    %s81 = sphi 0, %s67
    %s87 = sphi 0, %s89
    %s90 = sphi 0, %s87
    %s91 = sphi 0, %s90
    %s107 = sphi 0, %s91
  $region4: #{tpu_custom_call.1} parent=0 // loop_header_branch
    %12 = sbr.rel (%p10) target = $region8
  $region5: #{tpu_custom_call.1} parent=0 // loop_body
    %s14 = ssub.s32 %s9, 1
    %s15 = ssub.s32 %s9, 2
    %s16 = sadd.s32 %s9, 1
    %s17 = ssub.s32 %s9, %s16
    %p18 = scmp.eq.s32.totalorder %s17, 0
    %s20 = sadd.s32 %s19, 1
    %s21 = scalar_select %p18, %s19, %s20
    %p24 = pneg %p18
    %p25 = scmp.eq.s32.totalorder %s9, 1
    %p26 = por %p24, %p25
    %p27 = scmp.ne.s32.totalorder %s19, %s22
    %p28 = scmp.eq.s32.totalorder %s9, 0
    %p29 = por %p27, %p28
    %p30 = scmp.ne.s32.totalorder %s19, %s22
    %p31 = scmp.eq.s32.totalorder %s14, 1
    %p32 = por %p30, %p31
    %p33 = scmp.ne.s32.totalorder %s22, %s23
    %p34 = scmp.eq.s32.totalorder %s14, 0
    %p35 = por %p33, %p34
    %p36 = scmp.ne.s32.totalorder %s22, %s23
    %p37 = scmp.eq.s32.totalorder %s15, 1
    %p38 = por %p36, %p37
    %p40 = scmp.ne.s32.totalorder %s23, %s39
    %p41 = scmp.eq.s32.totalorder %s15, 0
    %p42 = por %p40, %p41
    %s44 = sadd.s32 %s43, 1
    %p47 = scmp.eq.s32.totalorder %s9, 1
    %p48 = scmp.ne.s32.totalorder %s43, %s45
    %p49 = scmp.eq.s32.totalorder %s9, 0
    %p50 = por %p48, %p49
    %p51 = scmp.ne.s32.totalorder %s43, %s45
    %p52 = scmp.eq.s32.totalorder %s14, 1
    %p53 = por %p51, %p52
    %p54 = scmp.ne.s32.totalorder %s45, %s46
    %p55 = scmp.eq.s32.totalorder %s14, 0
    %p56 = por %p54, %p55
    %p57 = scmp.ne.s32.totalorder %s45, %s46
    %p58 = scmp.eq.s32.totalorder %s15, 1
    %p59 = por %p57, %p58
    %p61 = scmp.ne.s32.totalorder %s46, %s60
    %p62 = scmp.eq.s32.totalorder %s15, 0
    %p63 = por %p61, %p62
    %s65 = sadd.s32 %s64, 1
    %p68 = scmp.eq.s32.totalorder %s9, 1
    %p69 = scmp.ne.s32.totalorder %s64, %s66
    %p70 = scmp.eq.s32.totalorder %s9, 0
    %p71 = por %p69, %p70
    %p72 = scmp.ne.s32.totalorder %s64, %s66
    %p73 = scmp.eq.s32.totalorder %s14, 1
    %p74 = por %p72, %p73
    %p75 = scmp.ne.s32.totalorder %s66, %s67
    %p76 = scmp.eq.s32.totalorder %s14, 0
    %p77 = por %p75, %p76
    %p78 = scmp.ne.s32.totalorder %s66, %s67
    %p79 = scmp.eq.s32.totalorder %s15, 1
    %p80 = por %p78, %p79
    %p82 = scmp.ne.s32.totalorder %s67, %s81
    %p83 = scmp.eq.s32.totalorder %s15, 0
    %p84 = por %p82, %p83
    %s85 = ssub.s32 %s9, %s16
    %p86 = scmp.eq.s32.totalorder %s85, 0
    %s88 = sadd.s32 %s87, 1
    %s89 = scalar_select %p86, %s87, %s88
    %p92 = pneg %p86
    %p93 = scmp.eq.s32.totalorder %s9, 1
    %p94 = por %p92, %p93
    %p95 = scmp.ne.s32.totalorder %s87, %s90
    %p96 = scmp.eq.s32.totalorder %s9, 0
    %p97 = por %p95, %p96
    %p98 = scmp.ne.s32.totalorder %s87, %s90
    %p99 = scmp.eq.s32.totalorder %s14, 1
    %p100 = por %p98, %p99
    %p101 = scmp.ne.s32.totalorder %s90, %s91
    %p102 = scmp.eq.s32.totalorder %s14, 0
    %p103 = por %p101, %p102
    %p104 = scmp.ne.s32.totalorder %s90, %s91
    %p105 = scmp.eq.s32.totalorder %s15, 1
    %p106 = por %p104, %p105
    %p108 = scmp.ne.s32.totalorder %s91, %s107
    %p109 = scmp.eq.s32.totalorder %s15, 0
    %p110 = por %p108, %p109
    %p111 = scmp.le.s32.totalorder 1, %s9
    %p112 = scmp.lt.s32.totalorder %s9, 3
    %p113 = pnand %p111, %p112
    %p114 = pneg %p113
    // Predicated region
    $region9: #{tpu_custom_call.1} parent=5 // pred_check
      _
    $region10: #{tpu_custom_call.1} parent=5 // pred_check_branch
      %116 = sbr.rel (%p113) target = $region12
    $region11: #{tpu_custom_call.1} parent=5 // pred_region
      %s117 = ssub.s32 %s9, 1
      // Predicated region
      $region13: #{tpu_custom_call.1} parent=11 // pred_check
        %p118 = pneg %p56
      $region14: #{tpu_custom_call.1} parent=11 // pred_check_branch
        %120 = sbr.rel (%p118) target = $region16
      $region15: #{tpu_custom_call.1} parent=11 // pred_region
        _
      $region16: #{tpu_custom_call.1} parent=11 // pred_fallthru
        _
      // Predicated region
      $region17: #{tpu_custom_call.1} parent=11 // pred_check
        %p121 = pneg %p77
      $region18: #{tpu_custom_call.1} parent=11 // pred_check_branch
        %123 = sbr.rel (%p121) target = $region20
      $region19: #{tpu_custom_call.1} parent=11 // pred_region
        _
      $region20: #{tpu_custom_call.1} parent=11 // pred_fallthru
        _
    $region12: #{tpu_custom_call.1} parent=5 // pred_fallthru
      _
    %p124 = scmp.lt.s32.totalorder %s9, 2
    // Predicated region
    $region21: #{tpu_custom_call.1} parent=5 // pred_check
      %p125 = pneg %p124
    $region22: #{tpu_custom_call.1} parent=5 // pred_check_branch
      %127 = sbr.rel (%p125) target = $region24
    $region23: #{tpu_custom_call.1} parent=5 // pred_region
      // Predicated region
      $region25: #{tpu_custom_call.1} parent=23 // pred_check
        %p128 = pneg %p29
      $region26: #{tpu_custom_call.1} parent=23 // pred_check_branch
        %130 = sbr.rel (%p128) target = $region28
      $region27: #{tpu_custom_call.1} parent=23 // pred_region
        %s131 = smul.u32 62, %s9
        %p132 = scmp.lt.s32.totalorder %s131, 123
        %s133 = scalar_select %p132, %s131, 123
        %s134 = smul.addr %s133, 4
        %s135 = scalar_lea.vmem %s0, %s134
        %s136 = smul.u32 62, %s9
      $region28: #{tpu_custom_call.1} parent=23 // pred_fallthru
        _
    $region24: #{tpu_custom_call.1} parent=5 // pred_fallthru
      _
    %p137 = scmp.le.s32.totalorder 1, %s9
    %p138 = scmp.lt.s32.totalorder %s9, 3
    %p139 = pnand %p137, %p138
    %p140 = pneg %p139
    // Predicated region
    $region29: #{tpu_custom_call.1} parent=5 // pred_check
      _
    $region30: #{tpu_custom_call.1} parent=5 // pred_check_branch
      %142 = sbr.rel (%p139) target = $region32
    $region31: #{tpu_custom_call.1} parent=5 // pred_region
      %s143 = ssub.s32 %s9, 1
      %s144 = smul.u32 62, %s14
      %p145 = scmp.lt.s32.totalorder %s144, 123
      %s146 = scalar_select %p145, %s144, 123
      %s147 = smul.addr %s146, 4
      %s148 = scalar_lea.vmem %s0, %s147
      %p149 = pneg %p35
      %p150 = pneg %p32
      %p151 = pneg %p56
      %p152 = pneg %p53
      %p153 = pneg %p77
      %p154 = pneg %p74
      %p155 = pneg %p103
      %p156 = pneg %p100
      %s157 = smul.u32 62, %s14
      %p158 = scmp.lt.s32.totalorder %s157, 123
      %s159 = scalar_select %p158, %s157, 123
      %s160 = smul.addr %s159, 4
      %s161 = scalar_lea.vmem %s3, %s160
      %s162 = smul.u32 62, %s14
      %p163 = scmp.lt.s32.totalorder %s162, 123
      %s164 = scalar_select %p163, %s162, 123
      %s165 = smul.addr %s164, 4
      %s166 = scalar_lea.vmem %s0, %s165
      %s167 = smul.u32 62, %s14
      %s168 = smul.u32 62, %s14
      %p169 = scmp.lt.s32.totalorder %s168, 123
      %s170 = scalar_select %p169, %s168, 123
      %s171 = smul.addr %s170, 4
      %s172 = scalar_lea.vmem %s3, %s171
      %s173 = smul.u32 62, %s14
      %v175 = vld [vmem:[%s166] sm:$0xf]
      %v176 = vld [vmem:[%s166 + $0x4] sm:$0xf]
      %v177 = vld [vmem:[%s166 + $0x8] sm:$0xf]
      %v178 = vld [vmem:[%s166 + $0xc] sm:$0xf]
      %v179 = vld [vmem:[%s166 + $0x10] sm:$0xf]
      %v180 = vld [vmem:[%s166 + $0x14] sm:$0xf]
      %v181 = vld [vmem:[%s166 + $0x18] sm:$0xf]
      %v182 = vld [vmem:[%s166 + $0x1c] sm:$0xf]
      %v183 = vld [vmem:[%s166 + $0x20] sm:$0xf]
      %v184 = vld [vmem:[%s166 + $0x24] sm:$0xf]
      %v185 = vld [vmem:[%s166 + $0x28] sm:$0xf]
      %v186 = vld [vmem:[%s166 + $0x2c] sm:$0xf]
      %v187 = vld [vmem:[%s166 + $0x30] sm:$0xf]
      %v188 = vld [vmem:[%s166 + $0x34] sm:$0xf]
      %v189 = vld [vmem:[%s166 + $0x38] sm:$0xf]
      %v190 = vld [vmem:[%s166 + $0x3c] sm:$0xf]
      %v191 = vld [vmem:[%s166 + $0x40] sm:$0xf]
      %v192 = vld [vmem:[%s166 + $0x44] sm:$0xf]
      %v193 = vld [vmem:[%s166 + $0x48] sm:$0xf]
      %v194 = vld [vmem:[%s166 + $0x4c] sm:$0xf]
      %v195 = vld [vmem:[%s166 + $0x50] sm:$0xf]
      %v196 = vld [vmem:[%s166 + $0x54] sm:$0xf]
      %v197 = vld [vmem:[%s166 + $0x58] sm:$0xf]
      %v198 = vld [vmem:[%s166 + $0x5c] sm:$0xf]
      %v199 = vld [vmem:[%s166 + $0x60] sm:$0xf]
      %v200 = vld [vmem:[%s166 + $0x64] sm:$0xf]
      %v201 = vld [vmem:[%s166 + $0x68] sm:$0xf]
      %v202 = vld [vmem:[%s166 + $0x6c] sm:$0xf]
      %v203 = vld [vmem:[%s166 + $0x70] sm:$0xf]
      %v204 = vld [vmem:[%s166 + $0x74] sm:$0xf]
      %v205 = vld [vmem:[%s166 + $0x78] sm:$0xf]
      %v206 = vld [vmem:[%s166 + $0x7c] sm:$0xf]
      %v207 = vld [vmem:[%s166 + $0x80] sm:$0xf]
      %v208 = vld [vmem:[%s166 + $0x84] sm:$0xf]
      %v209 = vld [vmem:[%s166 + $0x88] sm:$0xf]
      %v210 = vld [vmem:[%s166 + $0x8c] sm:$0xf]
      %v211 = vld [vmem:[%s166 + $0x90] sm:$0xf]
      %v212 = vld [vmem:[%s166 + $0x94] sm:$0xf]
      %v213 = vld [vmem:[%s166 + $0x98] sm:$0xf]
      %v214 = vld [vmem:[%s166 + $0x9c] sm:$0xf]
      %v215 = vld [vmem:[%s166 + $0xa0] sm:$0xf]
      %v216 = vld [vmem:[%s166 + $0xa4] sm:$0xf]
      %v217 = vld [vmem:[%s166 + $0xa8] sm:$0xf]
      %v218 = vld [vmem:[%s166 + $0xac] sm:$0xf]
      %v219 = vld [vmem:[%s166 + $0xb0] sm:$0xf]
      %v220 = vld [vmem:[%s166 + $0xb4] sm:$0xf]
      %v221 = vld [vmem:[%s166 + $0xb8] sm:$0xf]
      %v222 = vld [vmem:[%s166 + $0xbc] sm:$0xf]
      %v223 = vld [vmem:[%s166 + $0xc0] sm:$0xf]
      %v224 = vld [vmem:[%s166 + $0xc4] sm:$0xf]
      %v225 = vld [vmem:[%s166 + $0xc8] sm:$0xf]
      %v226 = vld [vmem:[%s166 + $0xcc] sm:$0xf]
      %v227 = vld [vmem:[%s166 + $0xd0] sm:$0xf]
      %v228 = vld [vmem:[%s166 + $0xd4] sm:$0xf]
      %v229 = vld [vmem:[%s166 + $0xd8] sm:$0xf]
      %v230 = vld [vmem:[%s166 + $0xdc] sm:$0xf]
      %v231 = vld [vmem:[%s166 + $0xe0] sm:$0xf]
      %v232 = vld [vmem:[%s166 + $0xe4] sm:$0xf]
      %v233 = vld [vmem:[%s166 + $0xe8] sm:$0xf]
      %v234 = vld [vmem:[%s166 + $0xec] sm:$0xf]
      %v235 = vld [vmem:[%s166 + $0xf0] sm:$0xf]
      %v236 = vld [vmem:[%s166 + $0xf4] sm:$0xf]
      %v237 = vld [vmem:[%s1] sm:$0xf]
      %v238 = vld [vmem:[%s1 + $0x4] sm:$0xf]
      %v239 = vld [vmem:[%s1 + $0x8] sm:$0xf]
      %v240 = vld [vmem:[%s1 + $0xc] sm:$0xf]
      %v241 = vld [vmem:[%s1 + $0x10] sm:$0xf]
      %v242 = vld [vmem:[%s1 + $0x14] sm:$0xf]
      %v243 = vld [vmem:[%s1 + $0x18] sm:$0xf]
      %v244 = vld [vmem:[%s1 + $0x1c] sm:$0xf]
      %v245 = vld [vmem:[%s1 + $0x20] sm:$0xf]
      %v246 = vld [vmem:[%s1 + $0x24] sm:$0x3]
      %v247 = vld [vmem:[%s2] sm:$0x1]
      %v249 = vlaneseq
      %v250 = vshrl.u32 %v249, 7
      %v251 = vsub.s32 0, %v250
      %v252 = vrot.slane %v247, %v251
      %v316 = vunpack.c.l.b16 %v175
      %v317 = vunpack.c.l.b16 %v176
      %v318 = vunpack.c.l.b16 %v177
      %v319 = vunpack.c.l.b16 %v178
      %v320 = vunpack.c.l.b16 %v179
      %v321 = vunpack.c.l.b16 %v180
      %v322 = vunpack.c.l.b16 %v181
      %v323 = vunpack.c.l.b16 %v182
      %v324 = vunpack.c.l.b16 %v183
      %v325 = vunpack.c.l.b16 %v184
      %v326 = vunpack.c.l.b16 %v185
      %v327 = vunpack.c.l.b16 %v186
      %v328 = vunpack.c.l.b16 %v187
      %v329 = vunpack.c.l.b16 %v188
      %v330 = vunpack.c.l.b16 %v189
      %v331 = vunpack.c.l.b16 %v190
      %v332 = vunpack.c.l.b16 %v191
      %v333 = vunpack.c.l.b16 %v192
      %v334 = vunpack.c.l.b16 %v193
      %v335 = vunpack.c.l.b16 %v194
      %v336 = vunpack.c.l.b16 %v195
      %v337 = vunpack.c.l.b16 %v196
      %v338 = vunpack.c.l.b16 %v197
      %v339 = vunpack.c.l.b16 %v198
      %v340 = vunpack.c.l.b16 %v199
      %v341 = vunpack.c.l.b16 %v200
      %v342 = vunpack.c.l.b16 %v201
      %v343 = vunpack.c.l.b16 %v202
      %v344 = vunpack.c.l.b16 %v203
      %v345 = vunpack.c.l.b16 %v204
      %v346 = vunpack.c.l.b16 %v205
      %v347 = vunpack.c.l.b16 %v206
      %v348 = vunpack.c.l.b16 %v207
      %v349 = vunpack.c.l.b16 %v208
      %v350 = vunpack.c.l.b16 %v209
      %v351 = vunpack.c.l.b16 %v210
      %v352 = vunpack.c.l.b16 %v211
      %v353 = vunpack.c.l.b16 %v212
      %v354 = vunpack.c.l.b16 %v213
      %v355 = vunpack.c.l.b16 %v214
      %v356 = vunpack.c.l.b16 %v215
      %v357 = vunpack.c.l.b16 %v216
      %v358 = vunpack.c.l.b16 %v217
      %v359 = vunpack.c.l.b16 %v218
      %v360 = vunpack.c.l.b16 %v219
      %v361 = vunpack.c.l.b16 %v220
      %v362 = vunpack.c.l.b16 %v221
      %v363 = vunpack.c.l.b16 %v222
      %v364 = vunpack.c.l.b16 %v223
      %v365 = vunpack.c.l.b16 %v224
      %v366 = vunpack.c.l.b16 %v225
      %v367 = vunpack.c.l.b16 %v226
      %v368 = vunpack.c.l.b16 %v227
      %v369 = vunpack.c.l.b16 %v228
      %v370 = vunpack.c.l.b16 %v229
      %v371 = vunpack.c.l.b16 %v230
      %v372 = vunpack.c.l.b16 %v231
      %v373 = vunpack.c.l.b16 %v232
      %v374 = vunpack.c.l.b16 %v233
      %v375 = vunpack.c.l.b16 %v234
      %v376 = vunpack.c.l.b16 %v235
      %v377 = vunpack.c.l.b16 %v236
      %v378 = vpack.c.b16 %v317, %v316
      %v379 = vpack.c.b16 %v319, %v318
      %v380 = vpack.c.b16 %v321, %v320
      %v381 = vpack.c.b16 %v323, %v322
      %v382 = vpack.c.b16 %v325, %v324
      %v383 = vpack.c.b16 %v327, %v326
      %v384 = vpack.c.b16 %v329, %v328
      %v385 = vpack.c.b16 %v331, %v330
      %v386 = vpack.c.b16 %v333, %v332
      %v387 = vpack.c.b16 %v335, %v334
      %v388 = vpack.c.b16 %v337, %v336
      %v389 = vpack.c.b16 %v339, %v338
      %v390 = vpack.c.b16 %v341, %v340
      %v391 = vpack.c.b16 %v343, %v342
      %v392 = vpack.c.b16 %v345, %v344
      %v393 = vpack.c.b16 %v347, %v346
      %v394 = vpack.c.b16 %v349, %v348
      %v395 = vpack.c.b16 %v351, %v350
      %v396 = vpack.c.b16 %v353, %v352
      %v397 = vpack.c.b16 %v355, %v354
      %v398 = vpack.c.b16 %v357, %v356
      %v399 = vpack.c.b16 %v359, %v358
      %v400 = vpack.c.b16 %v361, %v360
      %v401 = vpack.c.b16 %v363, %v362
      %v402 = vpack.c.b16 %v365, %v364
      %v403 = vpack.c.b16 %v367, %v366
      %v404 = vpack.c.b16 %v369, %v368
      %v405 = vpack.c.b16 %v371, %v370
      %v406 = vpack.c.b16 %v373, %v372
      %v407 = vpack.c.b16 %v375, %v374
      %v408 = vpack.c.b16 %v377, %v376
      %v419 = vunpack.c.l.b16 %v237
      %v420 = vunpack.c.l.b16 %v238
      %v421 = vunpack.c.l.b16 %v239
      %v422 = vunpack.c.l.b16 %v240
      %v423 = vunpack.c.l.b16 %v241
      %v424 = vunpack.c.l.b16 %v242
      %v425 = vunpack.c.l.b16 %v243
      %v426 = vunpack.c.l.b16 %v244
      %v427 = vunpack.c.l.b16 %v245
      %v428 = vunpack.c.l.b16 %v246
      %v429 = vpack.c.b16 %v420, %v419
      %v430 = vpack.c.b16 %v422, %v421
      %v431 = vpack.c.b16 %v424, %v423
      %v432 = vpack.c.b16 %v426, %v425
      %v433 = vpack.c.b16 %v428, %v427
      %vm438 = vcmask 613376
      %v440 = vsel %vm438, %v378, 0
      %v443 = vsel %vm438, %v379, 0
      %v446 = vsel %vm438, %v380, 0
      %v449 = vsel %vm438, %v381, 0
      %v452 = vsel %vm438, %v382, 0
      %v455 = vsel %vm438, %v383, 0
      %v458 = vsel %vm438, %v384, 0
      %v461 = vsel %vm438, %v385, 0
      %v464 = vsel %vm438, %v386, 0
      %v467 = vsel %vm438, %v387, 0
      %v470 = vsel %vm438, %v388, 0
      %v473 = vsel %vm438, %v389, 0
      %v476 = vsel %vm438, %v390, 0
      %v479 = vsel %vm438, %v391, 0
      %v482 = vsel %vm438, %v392, 0
      %v485 = vsel %vm438, %v393, 0
      %v488 = vsel %vm438, %v394, 0
      %v491 = vsel %vm438, %v395, 0
      %v494 = vsel %vm438, %v396, 0
      %v497 = vsel %vm438, %v397, 0
      %v500 = vsel %vm438, %v398, 0
      %v503 = vsel %vm438, %v399, 0
      %v506 = vsel %vm438, %v400, 0
      %v509 = vsel %vm438, %v401, 0
      %v512 = vsel %vm438, %v402, 0
      %v515 = vsel %vm438, %v403, 0
      %v518 = vsel %vm438, %v404, 0
      %v521 = vsel %vm438, %v405, 0
      %v524 = vsel %vm438, %v406, 0
      %v527 = vsel %vm438, %v407, 0
      %v530 = vsel %vm438, %v408, 0
      %vm532 = vcmask 1044480
      %vm533 = vcmask 1045504
      %v534 = vsel %vm532, 4294967295, 65535
      %v535 = vsel %vm533, %v534, 0
      %v537 = vand.u32 %v433, %v535
      %539 = vmatprep.subr.bf16.mxu0 0
      %540 = vmatpush1.bf16.msra.mxu0 %v429
      %541 = vmatprep.subr.bf16.mxu0 0
      %542 = vmatpush1.bf16.msra.mxu0 %v430
      %543 = vmatprep.subr.bf16.mxu0 0
      %544 = vmatpush1.bf16.msra.mxu0 %v431
      %545 = vmatprep.subr.bf16.mxu0 0
      %546 = vmatpush1.bf16.msra.mxu0 %v432
      %547 = vmatprep.subr.bf16.mxu0 0
      %548 = vmatpush1.bf16.msra.mxu0 %v537
      %549 = vmatprep.subr.bf16.mxu0 0
      %550 = vmatpush1.bf16.msra.mxu0 0
      %551 = vmatprep.subr.bf16.mxu0 0
      %552 = vmatpush1.bf16.msra.mxu0 0
      %553 = vmatprep.subr.bf16.mxu0 0
      %554 = vmatpush1.bf16.msra.mxu0 0
      %555 = vmatprep.subr.bf16.mxu0 0
      %556 = vmatpush1.bf16.msra.mxu0 0
      %557 = vmatprep.subr.bf16.mxu0 0
      %558 = vmatpush1.bf16.msra.mxu0 0
      %559 = vmatprep.subr.bf16.mxu0 0
      %560 = vmatpush1.bf16.msra.mxu0 0
      %561 = vmatprep.subr.bf16.mxu0 0
      %562 = vmatpush1.bf16.msra.mxu0 0
      %563 = vmatprep.subr.bf16.mxu0 0
      %564 = vmatpush1.bf16.msra.mxu0 0
      %565 = vmatprep.subr.bf16.mxu0 0
      %566 = vmatpush1.bf16.msra.mxu0 0
      %567 = vmatprep.subr.bf16.mxu0 0
      %568 = vmatpush1.bf16.msra.mxu0 0
      %569 = vmatprep.subr.bf16.mxu0 0
      %570 = vmatpush1.bf16.msra.mxu0 0
      %571 = vmatprep.mubr.bf16.mxu0 0
      %572 = vmatmul.mubr.bf16.gmra.mrb[0].mxu0 %v440
      %v573 = vpop.f32.mrb[0].mxu0
      %v574 = vadd.f32 %v252, %v573
      %v575 = vpop.f32.mrb[0].mxu0
      %v576 = vpop.f32.mrb[0].mxu0
      %v577 = vadd.f32 %v252, %v576
      %v578 = vpop.f32.mrb[0].mxu0
      %579 = vmatprep.mubr.bf16.mxu0 0
      %580 = vmatmul.mubr.bf16.gmra.mrb[0].mxu0 %v443
      %v581 = vpop.f32.mrb[0].mxu0
      %v582 = vadd.f32 %v252, %v581
      %v583 = vpop.f32.mrb[0].mxu0
      %v584 = vpop.f32.mrb[0].mxu0
      %v585 = vadd.f32 %v252, %v584
      %v586 = vpop.f32.mrb[0].mxu0
      %587 = vmatprep.mubr.bf16.mxu0 0
      %588 = vmatmul.mubr.bf16.gmra.mrb[0].mxu0 %v446
      %v589 = vpop.f32.mrb[0].mxu0
      %v590 = vadd.f32 %v252, %v589
      %v591 = vpop.f32.mrb[0].mxu0
      %v592 = vpop.f32.mrb[0].mxu0
      %v593 = vadd.f32 %v252, %v592
      %v594 = vpop.f32.mrb[0].mxu0
      %595 = vmatprep.mubr.bf16.mxu0 0
      %596 = vmatmul.mubr.bf16.gmra.mrb[0].mxu0 %v449
      %v597 = vpop.f32.mrb[0].mxu0
      %v598 = vadd.f32 %v252, %v597
      %v599 = vpop.f32.mrb[0].mxu0
      %v600 = vpop.f32.mrb[0].mxu0
      %v601 = vadd.f32 %v252, %v600
      %v602 = vpop.f32.mrb[0].mxu0
      %603 = vmatprep.mubr.bf16.mxu0 0
      %604 = vmatmul.mubr.bf16.gmra.mrb[0].mxu0 %v452
      %v605 = vpop.f32.mrb[0].mxu0
      %v606 = vadd.f32 %v252, %v605
      %v607 = vpop.f32.mrb[0].mxu0
      %v608 = vpop.f32.mrb[0].mxu0
      %v609 = vadd.f32 %v252, %v608
      %v610 = vpop.f32.mrb[0].mxu0
      %611 = vmatprep.mubr.bf16.mxu0 0
      %612 = vmatmul.mubr.bf16.gmra.mrb[0].mxu0 %v455
      %v613 = vpop.f32.mrb[0].mxu0
      %v614 = vadd.f32 %v252, %v613
      %v615 = vpop.f32.mrb[0].mxu0
      %v616 = vpop.f32.mrb[0].mxu0
      %v617 = vadd.f32 %v252, %v616
      %v618 = vpop.f32.mrb[0].mxu0
      %619 = vmatprep.mubr.bf16.mxu0 0
      %620 = vmatmul.mubr.bf16.gmra.mrb[0].mxu0 %v458
      %v621 = vpop.f32.mrb[0].mxu0
      %v622 = vadd.f32 %v252, %v621
      %v623 = vpop.f32.mrb[0].mxu0
      %v624 = vpop.f32.mrb[0].mxu0
      %v625 = vadd.f32 %v252, %v624
      %v626 = vpop.f32.mrb[0].mxu0
      %627 = vmatprep.mubr.bf16.mxu0 0
      %628 = vmatmul.mubr.bf16.gmra.mrb[0].mxu0 %v461
      %v629 = vpop.f32.mrb[0].mxu0
      %v630 = vadd.f32 %v252, %v629
      %v631 = vpop.f32.mrb[0].mxu0
      %v632 = vpop.f32.mrb[0].mxu0
      %v633 = vadd.f32 %v252, %v632
      %v634 = vpop.f32.mrb[0].mxu0
      %635 = vmatprep.mubr.bf16.mxu0 0
      %636 = vmatmul.mubr.bf16.gmra.mrb[0].mxu0 %v464
      %v637 = vpop.f32.mrb[0].mxu0
      %v638 = vadd.f32 %v252, %v637
      %v639 = vpop.f32.mrb[0].mxu0
      %v640 = vpop.f32.mrb[0].mxu0
      %v641 = vadd.f32 %v252, %v640
      %v642 = vpop.f32.mrb[0].mxu0
      %643 = vmatprep.mubr.bf16.mxu0 0
      %644 = vmatmul.mubr.bf16.gmra.mrb[0].mxu0 %v467
      %v645 = vpop.f32.mrb[0].mxu0
      %v646 = vadd.f32 %v252, %v645
      %v647 = vpop.f32.mrb[0].mxu0
      %v648 = vpop.f32.mrb[0].mxu0
      %v649 = vadd.f32 %v252, %v648
      %v650 = vpop.f32.mrb[0].mxu0
      %651 = vmatprep.mubr.bf16.mxu0 0
      %652 = vmatmul.mubr.bf16.gmra.mrb[0].mxu0 %v470
      %v653 = vpop.f32.mrb[0].mxu0
      %v654 = vadd.f32 %v252, %v653
      %v655 = vpop.f32.mrb[0].mxu0
      %v656 = vpop.f32.mrb[0].mxu0
      %v657 = vadd.f32 %v252, %v656
      %v658 = vpop.f32.mrb[0].mxu0
      %659 = vmatprep.mubr.bf16.mxu0 0
      %660 = vmatmul.mubr.bf16.gmra.mrb[0].mxu0 %v473
      %v661 = vpop.f32.mrb[0].mxu0
      %v662 = vadd.f32 %v252, %v661
      %v663 = vpop.f32.mrb[0].mxu0
      %v664 = vpop.f32.mrb[0].mxu0
      %v665 = vadd.f32 %v252, %v664
      %v666 = vpop.f32.mrb[0].mxu0
      %667 = vmatprep.mubr.bf16.mxu0 0
      %668 = vmatmul.mubr.bf16.gmra.mrb[0].mxu0 %v476
      %v669 = vpop.f32.mrb[0].mxu0
      %v670 = vadd.f32 %v252, %v669
      %v671 = vpop.f32.mrb[0].mxu0
      %v672 = vpop.f32.mrb[0].mxu0
      %v673 = vadd.f32 %v252, %v672
      %v674 = vpop.f32.mrb[0].mxu0
      %675 = vmatprep.mubr.bf16.mxu0 0
      %676 = vmatmul.mubr.bf16.gmra.mrb[0].mxu0 %v479
      %v677 = vpop.f32.mrb[0].mxu0
      %v678 = vadd.f32 %v252, %v677
      %v679 = vpop.f32.mrb[0].mxu0
      %v680 = vpop.f32.mrb[0].mxu0
      %v681 = vadd.f32 %v252, %v680
      %v682 = vpop.f32.mrb[0].mxu0
      %683 = vmatprep.mubr.bf16.mxu0 0
      %684 = vmatmul.mubr.bf16.gmra.mrb[0].mxu0 %v482
      %v685 = vpop.f32.mrb[0].mxu0
      %v686 = vadd.f32 %v252, %v685
      %v687 = vpop.f32.mrb[0].mxu0
      %v688 = vpop.f32.mrb[0].mxu0
      %v689 = vadd.f32 %v252, %v688
      %v690 = vpop.f32.mrb[0].mxu0
      %691 = vmatprep.mubr.bf16.mxu0 0
      %692 = vmatmul.mubr.bf16.gmra.mrb[0].mxu0 %v485
      %v693 = vpop.f32.mrb[0].mxu0
      %v694 = vadd.f32 %v252, %v693
      %v695 = vpop.f32.mrb[0].mxu0
      %v696 = vpop.f32.mrb[0].mxu0
      %v697 = vadd.f32 %v252, %v696
      %v698 = vpop.f32.mrb[0].mxu0
      %699 = vmatprep.mubr.bf16.mxu0 0
      %700 = vmatmul.mubr.bf16.gmra.mrb[0].mxu0 %v488
      %v701 = vpop.f32.mrb[0].mxu0
      %v702 = vadd.f32 %v252, %v701
      %v703 = vpop.f32.mrb[0].mxu0
      %v704 = vpop.f32.mrb[0].mxu0
      %v705 = vadd.f32 %v252, %v704
      %v706 = vpop.f32.mrb[0].mxu0
      %707 = vmatprep.mubr.bf16.mxu0 0
      %708 = vmatmul.mubr.bf16.gmra.mrb[0].mxu0 %v491
      %v709 = vpop.f32.mrb[0].mxu0
      %v710 = vadd.f32 %v252, %v709
      %v711 = vpop.f32.mrb[0].mxu0
      %v712 = vpop.f32.mrb[0].mxu0
      %v713 = vadd.f32 %v252, %v712
      %v714 = vpop.f32.mrb[0].mxu0
      %715 = vmatprep.mubr.bf16.mxu0 0
      %716 = vmatmul.mubr.bf16.gmra.mrb[0].mxu0 %v494
      %v717 = vpop.f32.mrb[0].mxu0
      %v718 = vadd.f32 %v252, %v717
      %v719 = vpop.f32.mrb[0].mxu0
      %v720 = vpop.f32.mrb[0].mxu0
      %v721 = vadd.f32 %v252, %v720
      %v722 = vpop.f32.mrb[0].mxu0
      %723 = vmatprep.mubr.bf16.mxu0 0
      %724 = vmatmul.mubr.bf16.gmra.mrb[0].mxu0 %v497
      %v725 = vpop.f32.mrb[0].mxu0
      %v726 = vadd.f32 %v252, %v725
      %v727 = vpop.f32.mrb[0].mxu0
      %v728 = vpop.f32.mrb[0].mxu0
      %v729 = vadd.f32 %v252, %v728
      %v730 = vpop.f32.mrb[0].mxu0
      %731 = vmatprep.mubr.bf16.mxu0 0
      %732 = vmatmul.mubr.bf16.gmra.mrb[0].mxu0 %v500
      %v733 = vpop.f32.mrb[0].mxu0
      %v734 = vadd.f32 %v252, %v733
      %v735 = vpop.f32.mrb[0].mxu0
      %v736 = vpop.f32.mrb[0].mxu0
      %v737 = vadd.f32 %v252, %v736
      %v738 = vpop.f32.mrb[0].mxu0
      %739 = vmatprep.mubr.bf16.mxu0 0
      %740 = vmatmul.mubr.bf16.gmra.mrb[0].mxu0 %v503
      %v741 = vpop.f32.mrb[0].mxu0
      %v742 = vadd.f32 %v252, %v741
      %v743 = vpop.f32.mrb[0].mxu0
      %v744 = vpop.f32.mrb[0].mxu0
      %v745 = vadd.f32 %v252, %v744
      %v746 = vpop.f32.mrb[0].mxu0
      %747 = vmatprep.mubr.bf16.mxu0 0
      %748 = vmatmul.mubr.bf16.gmra.mrb[0].mxu0 %v506
      %v749 = vpop.f32.mrb[0].mxu0
      %v750 = vadd.f32 %v252, %v749
      %v751 = vpop.f32.mrb[0].mxu0
      %v752 = vpop.f32.mrb[0].mxu0
      %v753 = vadd.f32 %v252, %v752
      %v754 = vpop.f32.mrb[0].mxu0
      %755 = vmatprep.mubr.bf16.mxu0 0
      %756 = vmatmul.mubr.bf16.gmra.mrb[0].mxu0 %v509
      %v757 = vpop.f32.mrb[0].mxu0
      %v758 = vadd.f32 %v252, %v757
      %v759 = vpop.f32.mrb[0].mxu0
      %v760 = vpop.f32.mrb[0].mxu0
      %v761 = vadd.f32 %v252, %v760
      %v762 = vpop.f32.mrb[0].mxu0
      %763 = vmatprep.mubr.bf16.mxu0 0
      %764 = vmatmul.mubr.bf16.gmra.mrb[0].mxu0 %v512
      %v765 = vpop.f32.mrb[0].mxu0
      %v766 = vadd.f32 %v252, %v765
      %v767 = vpop.f32.mrb[0].mxu0
      %v768 = vpop.f32.mrb[0].mxu0
      %v769 = vadd.f32 %v252, %v768
      %v770 = vpop.f32.mrb[0].mxu0
      %771 = vmatprep.mubr.bf16.mxu0 0
      %772 = vmatmul.mubr.bf16.gmra.mrb[0].mxu0 %v515
      %v773 = vpop.f32.mrb[0].mxu0
      %v774 = vadd.f32 %v252, %v773
      %v775 = vpop.f32.mrb[0].mxu0
      %v776 = vpop.f32.mrb[0].mxu0
      %v777 = vadd.f32 %v252, %v776
      %v778 = vpop.f32.mrb[0].mxu0
      %779 = vmatprep.mubr.bf16.mxu0 0
      %780 = vmatmul.mubr.bf16.gmra.mrb[0].mxu0 %v518
      %v781 = vpop.f32.mrb[0].mxu0
      %v782 = vadd.f32 %v252, %v781
      %v783 = vpop.f32.mrb[0].mxu0
      %v784 = vpop.f32.mrb[0].mxu0
      %v785 = vadd.f32 %v252, %v784
      %v786 = vpop.f32.mrb[0].mxu0
      %787 = vmatprep.mubr.bf16.mxu0 0
      %788 = vmatmul.mubr.bf16.gmra.mrb[0].mxu0 %v521
      %v789 = vpop.f32.mrb[0].mxu0
      %v790 = vadd.f32 %v252, %v789
      %v791 = vpop.f32.mrb[0].mxu0
      %v792 = vpop.f32.mrb[0].mxu0
      %v793 = vadd.f32 %v252, %v792
      %v794 = vpop.f32.mrb[0].mxu0
      %795 = vmatprep.mubr.bf16.mxu0 0
      %796 = vmatmul.mubr.bf16.gmra.mrb[0].mxu0 %v524
      %v797 = vpop.f32.mrb[0].mxu0
      %v798 = vadd.f32 %v252, %v797
      %v799 = vpop.f32.mrb[0].mxu0
      %v800 = vpop.f32.mrb[0].mxu0
      %v801 = vadd.f32 %v252, %v800
      %v802 = vpop.f32.mrb[0].mxu0
      %803 = vmatprep.mubr.bf16.mxu0 0
      %804 = vmatmul.mubr.bf16.gmra.mrb[0].mxu0 %v527
      %v805 = vpop.f32.mrb[0].mxu0
      %v806 = vadd.f32 %v252, %v805
      %v807 = vpop.f32.mrb[0].mxu0
      %v808 = vpop.f32.mrb[0].mxu0
      %v809 = vadd.f32 %v252, %v808
      %v810 = vpop.f32.mrb[0].mxu0
      %811 = vmatprep.mubr.bf16.mxu0 0
      %812 = vmatmul.mubr.bf16.gmra.mrb[0].mxu0 %v530
      %v813 = vpop.f32.mrb[0].mxu0
      %v814 = vadd.f32 %v252, %v813
      %v815 = vpop.f32.mrb[0].mxu0
      %v816 = vpop.f32.mrb[0].mxu0
      %v817 = vadd.f32 %v252, %v816
      %v818 = vpop.f32.mrb[0].mxu0
      %819 = vdwg.mxu0
      %v820 = vpack.c.bf16 %v577, %v574
      %v821 = vpack.c.bf16 %v585, %v582
      %v822 = vpack.c.bf16 %v593, %v590
      %v823 = vpack.c.bf16 %v601, %v598
      %v824 = vpack.c.bf16 %v609, %v606
      %v825 = vpack.c.bf16 %v617, %v614
      %v826 = vpack.c.bf16 %v625, %v622
      %v827 = vpack.c.bf16 %v633, %v630
      %v828 = vpack.c.bf16 %v641, %v638
      %v829 = vpack.c.bf16 %v649, %v646
      %v830 = vpack.c.bf16 %v657, %v654
      %v831 = vpack.c.bf16 %v665, %v662
      %v832 = vpack.c.bf16 %v673, %v670
      %v833 = vpack.c.bf16 %v681, %v678
      %v834 = vpack.c.bf16 %v689, %v686
      %v835 = vpack.c.bf16 %v697, %v694
      %v836 = vpack.c.bf16 %v705, %v702
      %v837 = vpack.c.bf16 %v713, %v710
      %v838 = vpack.c.bf16 %v721, %v718
      %v839 = vpack.c.bf16 %v729, %v726
      %v840 = vpack.c.bf16 %v737, %v734
      %v841 = vpack.c.bf16 %v745, %v742
      %v842 = vpack.c.bf16 %v753, %v750
      %v843 = vpack.c.bf16 %v761, %v758
      %v844 = vpack.c.bf16 %v769, %v766
      %v845 = vpack.c.bf16 %v777, %v774
      %v846 = vpack.c.bf16 %v785, %v782
      %v847 = vpack.c.bf16 %v793, %v790
      %v848 = vpack.c.bf16 %v801, %v798
      %v849 = vpack.c.bf16 %v809, %v806
      %v850 = vpack.c.bf16 %v817, %v814
      %v882 = vunpack.c.l.b16 %v820
      %v883 = vunpack.c.h.b16 %v820
      %v884 = vunpack.c.l.b16 %v821
      %v885 = vunpack.c.h.b16 %v821
      %v886 = vunpack.c.l.b16 %v822
      %v887 = vunpack.c.h.b16 %v822
      %v888 = vunpack.c.l.b16 %v823
      %v889 = vunpack.c.h.b16 %v823
      %v890 = vunpack.c.l.b16 %v824
      %v891 = vunpack.c.h.b16 %v824
      %v892 = vunpack.c.l.b16 %v825
      %v893 = vunpack.c.h.b16 %v825
      %v894 = vunpack.c.l.b16 %v826
      %v895 = vunpack.c.h.b16 %v826
      %v896 = vunpack.c.l.b16 %v827
      %v897 = vunpack.c.h.b16 %v827
      %v898 = vunpack.c.l.b16 %v828
      %v899 = vunpack.c.h.b16 %v828
      %v900 = vunpack.c.l.b16 %v829
      %v901 = vunpack.c.h.b16 %v829
      %v902 = vunpack.c.l.b16 %v830
      %v903 = vunpack.c.h.b16 %v830
      %v904 = vunpack.c.l.b16 %v831
      %v905 = vunpack.c.h.b16 %v831
      %v906 = vunpack.c.l.b16 %v832
      %v907 = vunpack.c.h.b16 %v832
      %v908 = vunpack.c.l.b16 %v833
      %v909 = vunpack.c.h.b16 %v833
      %v910 = vunpack.c.l.b16 %v834
      %v911 = vunpack.c.h.b16 %v834
      %v912 = vunpack.c.l.b16 %v835
      %v913 = vunpack.c.h.b16 %v835
      %v914 = vunpack.c.l.b16 %v836
      %v915 = vunpack.c.h.b16 %v836
      %v916 = vunpack.c.l.b16 %v837
      %v917 = vunpack.c.h.b16 %v837
      %v918 = vunpack.c.l.b16 %v838
      %v919 = vunpack.c.h.b16 %v838
      %v920 = vunpack.c.l.b16 %v839
      %v921 = vunpack.c.h.b16 %v839
      %v922 = vunpack.c.l.b16 %v840
      %v923 = vunpack.c.h.b16 %v840
      %v924 = vunpack.c.l.b16 %v841
      %v925 = vunpack.c.h.b16 %v841
      %v926 = vunpack.c.l.b16 %v842
      %v927 = vunpack.c.h.b16 %v842
      %v928 = vunpack.c.l.b16 %v843
      %v929 = vunpack.c.h.b16 %v843
      %v930 = vunpack.c.l.b16 %v844
      %v931 = vunpack.c.h.b16 %v844
      %v932 = vunpack.c.l.b16 %v845
      %v933 = vunpack.c.h.b16 %v845
      %v934 = vunpack.c.l.b16 %v846
      %v935 = vunpack.c.h.b16 %v846
      %v936 = vunpack.c.l.b16 %v847
      %v937 = vunpack.c.h.b16 %v847
      %v938 = vunpack.c.l.b16 %v848
      %v939 = vunpack.c.h.b16 %v848
      %v940 = vunpack.c.l.b16 %v849
      %v941 = vunpack.c.h.b16 %v849
      %v942 = vunpack.c.l.b16 %v850
      %v943 = vunpack.c.h.b16 %v850
      %v944 = vpack.c.b16 %v882, %v882
      %v945 = vpack.c.b16 %v883, %v883
      %v946 = vpack.c.b16 %v884, %v884
      %v947 = vpack.c.b16 %v885, %v885
      %v948 = vpack.c.b16 %v886, %v886
      %v949 = vpack.c.b16 %v887, %v887
      %v950 = vpack.c.b16 %v888, %v888
      %v951 = vpack.c.b16 %v889, %v889
      %v952 = vpack.c.b16 %v890, %v890
      %v953 = vpack.c.b16 %v891, %v891
      %v954 = vpack.c.b16 %v892, %v892
      %v955 = vpack.c.b16 %v893, %v893
      %v956 = vpack.c.b16 %v894, %v894
      %v957 = vpack.c.b16 %v895, %v895
      %v958 = vpack.c.b16 %v896, %v896
      %v959 = vpack.c.b16 %v897, %v897
      %v960 = vpack.c.b16 %v898, %v898
      %v961 = vpack.c.b16 %v899, %v899
      %v962 = vpack.c.b16 %v900, %v900
      %v963 = vpack.c.b16 %v901, %v901
      %v964 = vpack.c.b16 %v902, %v902
      %v965 = vpack.c.b16 %v903, %v903
      %v966 = vpack.c.b16 %v904, %v904
      %v967 = vpack.c.b16 %v905, %v905
      %v968 = vpack.c.b16 %v906, %v906
      %v969 = vpack.c.b16 %v907, %v907
      %v970 = vpack.c.b16 %v908, %v908
      %v971 = vpack.c.b16 %v909, %v909
      %v972 = vpack.c.b16 %v910, %v910
      %v973 = vpack.c.b16 %v911, %v911
      %v974 = vpack.c.b16 %v912, %v912
      %v975 = vpack.c.b16 %v913, %v913
      %v976 = vpack.c.b16 %v914, %v914
      %v977 = vpack.c.b16 %v915, %v915
      %v978 = vpack.c.b16 %v916, %v916
      %v979 = vpack.c.b16 %v917, %v917
      %v980 = vpack.c.b16 %v918, %v918
      %v981 = vpack.c.b16 %v919, %v919
      %v982 = vpack.c.b16 %v920, %v920
      %v983 = vpack.c.b16 %v921, %v921
      %v984 = vpack.c.b16 %v922, %v922
      %v985 = vpack.c.b16 %v923, %v923
      %v986 = vpack.c.b16 %v924, %v924
      %v987 = vpack.c.b16 %v925, %v925
      %v988 = vpack.c.b16 %v926, %v926
      %v989 = vpack.c.b16 %v927, %v927
      %v990 = vpack.c.b16 %v928, %v928
      %v991 = vpack.c.b16 %v929, %v929
      %v992 = vpack.c.b16 %v930, %v930
      %v993 = vpack.c.b16 %v931, %v931
      %v994 = vpack.c.b16 %v932, %v932
      %v995 = vpack.c.b16 %v933, %v933
      %v996 = vpack.c.b16 %v934, %v934
      %v997 = vpack.c.b16 %v935, %v935
      %v998 = vpack.c.b16 %v936, %v936
      %v999 = vpack.c.b16 %v937, %v937
      %v1000 = vpack.c.b16 %v938, %v938
      %v1001 = vpack.c.b16 %v939, %v939
      %v1002 = vpack.c.b16 %v940, %v940
      %v1003 = vpack.c.b16 %v941, %v941
      %v1004 = vpack.c.b16 %v942, %v942
      %v1005 = vpack.c.b16 %v943, %v943
      %vm1068 = vcmask 191488
      %1069 = vst.msk [vmem:[%s172] sm:$0xf] %vm1068, %v944
      %1070 = vst.msk [vmem:[%s172 + $0x4] sm:$0xf] %vm1068, %v945
      %1071 = vst.msk [vmem:[%s172 + $0x8] sm:$0xf] %vm1068, %v946
      %1072 = vst.msk [vmem:[%s172 + $0xc] sm:$0xf] %vm1068, %v947
      %1073 = vst.msk [vmem:[%s172 + $0x10] sm:$0xf] %vm1068, %v948
      %1074 = vst.msk [vmem:[%s172 + $0x14] sm:$0xf] %vm1068, %v949
      %1075 = vst.msk [vmem:[%s172 + $0x18] sm:$0xf] %vm1068, %v950
      %1076 = vst.msk [vmem:[%s172 + $0x1c] sm:$0xf] %vm1068, %v951
      %1077 = vst.msk [vmem:[%s172 + $0x20] sm:$0xf] %vm1068, %v952
      %1078 = vst.msk [vmem:[%s172 + $0x24] sm:$0xf] %vm1068, %v953
      %1079 = vst.msk [vmem:[%s172 + $0x28] sm:$0xf] %vm1068, %v954
      %1080 = vst.msk [vmem:[%s172 + $0x2c] sm:$0xf] %vm1068, %v955
      %1081 = vst.msk [vmem:[%s172 + $0x30] sm:$0xf] %vm1068, %v956
      %1082 = vst.msk [vmem:[%s172 + $0x34] sm:$0xf] %vm1068, %v957
      %1083 = vst.msk [vmem:[%s172 + $0x38] sm:$0xf] %vm1068, %v958
      %1084 = vst.msk [vmem:[%s172 + $0x3c] sm:$0xf] %vm1068, %v959
      %1085 = vst.msk [vmem:[%s172 + $0x40] sm:$0xf] %vm1068, %v960
      %1086 = vst.msk [vmem:[%s172 + $0x44] sm:$0xf] %vm1068, %v961
      %1087 = vst.msk [vmem:[%s172 + $0x48] sm:$0xf] %vm1068, %v962
      %1088 = vst.msk [vmem:[%s172 + $0x4c] sm:$0xf] %vm1068, %v963
      %1089 = vst.msk [vmem:[%s172 + $0x50] sm:$0xf] %vm1068, %v964
      %1090 = vst.msk [vmem:[%s172 + $0x54] sm:$0xf] %vm1068, %v965
      %1091 = vst.msk [vmem:[%s172 + $0x58] sm:$0xf] %vm1068, %v966
      %1092 = vst.msk [vmem:[%s172 + $0x5c] sm:$0xf] %vm1068, %v967
      %1093 = vst.msk [vmem:[%s172 + $0x60] sm:$0xf] %vm1068, %v968
      %1094 = vst.msk [vmem:[%s172 + $0x64] sm:$0xf] %vm1068, %v969
      %1095 = vst.msk [vmem:[%s172 + $0x68] sm:$0xf] %vm1068, %v970
      %1096 = vst.msk [vmem:[%s172 + $0x6c] sm:$0xf] %vm1068, %v971
      %1097 = vst.msk [vmem:[%s172 + $0x70] sm:$0xf] %vm1068, %v972
      %1098 = vst.msk [vmem:[%s172 + $0x74] sm:$0xf] %vm1068, %v973
      %1099 = vst.msk [vmem:[%s172 + $0x78] sm:$0xf] %vm1068, %v974
      %1100 = vst.msk [vmem:[%s172 + $0x7c] sm:$0xf] %vm1068, %v975
      %1101 = vst.msk [vmem:[%s172 + $0x80] sm:$0xf] %vm1068, %v976
      %1102 = vst.msk [vmem:[%s172 + $0x84] sm:$0xf] %vm1068, %v977
      %1103 = vst.msk [vmem:[%s172 + $0x88] sm:$0xf] %vm1068, %v978
      %1104 = vst.msk [vmem:[%s172 + $0x8c] sm:$0xf] %vm1068, %v979
      %1105 = vst.msk [vmem:[%s172 + $0x90] sm:$0xf] %vm1068, %v980
      %1106 = vst.msk [vmem:[%s172 + $0x94] sm:$0xf] %vm1068, %v981
      %1107 = vst.msk [vmem:[%s172 + $0x98] sm:$0xf] %vm1068, %v982
      %1108 = vst.msk [vmem:[%s172 + $0x9c] sm:$0xf] %vm1068, %v983
      %1109 = vst.msk [vmem:[%s172 + $0xa0] sm:$0xf] %vm1068, %v984
      %1110 = vst.msk [vmem:[%s172 + $0xa4] sm:$0xf] %vm1068, %v985
      %1111 = vst.msk [vmem:[%s172 + $0xa8] sm:$0xf] %vm1068, %v986
      %1112 = vst.msk [vmem:[%s172 + $0xac] sm:$0xf] %vm1068, %v987
      %1113 = vst.msk [vmem:[%s172 + $0xb0] sm:$0xf] %vm1068, %v988
      %1114 = vst.msk [vmem:[%s172 + $0xb4] sm:$0xf] %vm1068, %v989
      %1115 = vst.msk [vmem:[%s172 + $0xb8] sm:$0xf] %vm1068, %v990
      %1116 = vst.msk [vmem:[%s172 + $0xbc] sm:$0xf] %vm1068, %v991
      %1117 = vst.msk [vmem:[%s172 + $0xc0] sm:$0xf] %vm1068, %v992
      %1118 = vst.msk [vmem:[%s172 + $0xc4] sm:$0xf] %vm1068, %v993
      %1119 = vst.msk [vmem:[%s172 + $0xc8] sm:$0xf] %vm1068, %v994
      %1120 = vst.msk [vmem:[%s172 + $0xcc] sm:$0xf] %vm1068, %v995
      %1121 = vst.msk [vmem:[%s172 + $0xd0] sm:$0xf] %vm1068, %v996
      %1122 = vst.msk [vmem:[%s172 + $0xd4] sm:$0xf] %vm1068, %v997
      %1123 = vst.msk [vmem:[%s172 + $0xd8] sm:$0xf] %vm1068, %v998
      %1124 = vst.msk [vmem:[%s172 + $0xdc] sm:$0xf] %vm1068, %v999
      %1125 = vst.msk [vmem:[%s172 + $0xe0] sm:$0xf] %vm1068, %v1000
      %1126 = vst.msk [vmem:[%s172 + $0xe4] sm:$0xf] %vm1068, %v1001
      %1127 = vst.msk [vmem:[%s172 + $0xe8] sm:$0xf] %vm1068, %v1002
      %1128 = vst.msk [vmem:[%s172 + $0xec] sm:$0xf] %vm1068, %v1003
      %1129 = vst.msk [vmem:[%s172 + $0xf0] sm:$0xf] %vm1068, %v1004
      %1130 = vst.msk [vmem:[%s172 + $0xf4] sm:$0xf] %vm1068, %v1005
      %s1131 = smul.u32 62, %s14
      %p1132 = scmp.lt.s32.totalorder %s1131, 123
      %s1133 = scalar_select %p1132, %s1131, 123
      %s1134 = smul.addr %s1133, 4
      %s1135 = scalar_lea.vmem %s3, %s1134
      // Predicated region
      $region33: #{tpu_custom_call.1} parent=31 // pred_check
        %p1136 = pneg %p100
      $region34: #{tpu_custom_call.1} parent=31 // pred_check_branch
        %1138 = sbr.rel (%p1136) target = $region36
      $region35: #{tpu_custom_call.1} parent=31 // pred_region
        %s1139 = smul.u32 62, %s14
      $region36: #{tpu_custom_call.1} parent=31 // pred_fallthru
        _
    $region32: #{tpu_custom_call.1} parent=5 // pred_fallthru
      _
    %p1140 = scmp.le.s32.totalorder 2, %s9
    // Predicated region
    $region37: #{tpu_custom_call.1} parent=5 // pred_check
      %p1141 = pneg %p1140
    $region38: #{tpu_custom_call.1} parent=5 // pred_check_branch
      %1143 = sbr.rel (%p1141) target = $region40
    $region39: #{tpu_custom_call.1} parent=5 // pred_region
      %s1144 = ssub.s32 %s9, 2
      // Predicated region
      $region41: #{tpu_custom_call.1} parent=39 // pred_check
        %p1145 = pneg %p106
      $region42: #{tpu_custom_call.1} parent=39 // pred_check_branch
        %1147 = sbr.rel (%p1145) target = $region44
      $region43: #{tpu_custom_call.1} parent=39 // pred_region
        %s1148 = smul.u32 62, %s15
        %p1149 = scmp.lt.s32.totalorder %s1148, 123
        %s1150 = scalar_select %p1149, %s1148, 123
        %s1151 = smul.addr %s1150, 4
        %s1152 = scalar_lea.vmem %s3, %s1151
      $region44: #{tpu_custom_call.1} parent=39 // pred_fallthru
        _
    $region40: #{tpu_custom_call.1} parent=5 // pred_fallthru
      _
  $region6: #{tpu_custom_call.1} parent=0 // loop_footer
    %s13 = sadd.s32 1, %s9
  $region7: #{tpu_custom_call.1} parent=0 // loop_footer_branch
    %8 = sbr.rel target = $region3
  $region8: #{tpu_custom_call.1} parent=0 // loop_exit
    _

</llo_original>
